<compile_context>
chip_gen: v7x
topology: tpu7x:2x2x1
jax: 0.10.0
libtpu: 0.0.40
codegen_flags: <defaults>
</compile_context>

<pallas_src>
import functools

import jax
import jax.numpy as jnp
from jax import lax
from jax.experimental import pallas as pl
from jax.experimental.pallas import tpu as pltpu


# ---------------------------------------------------------------------------
# Per-generation VMEM budget and tile defaults
# ---------------------------------------------------------------------------
def _vmem_capacity_bytes():
    try:
        info = pltpu.get_tpu_info()
        for name in ("vmem_capacity_bytes", "vmem_size_bytes", "vmem_bytes"):
            v = getattr(info, name, None)
            if v:
                return int(v)
    except Exception:
        pass
    return 64 * 1024 * 1024          # conservative (v7x-sized) fallback


_VMEM_CAP = _vmem_capacity_bytes()
# ~75% of the scratchpad: ~96 MiB on the 128 MiB parts (v5e/v6e), ~48 MiB on
# v7x (64 MiB per TensorCore).  Headroom is left for compiler-internal scratch.
_VMEM_LIMIT_BYTES = min((_VMEM_CAP * 3) // 4, 100 * 1024 * 1024)
_BIG_VMEM = _VMEM_CAP >= 96 * 1024 * 1024

if _BIG_VMEM:       # v5e / v6e (128 MiB VMEM): bigger tiles -> fewer HBM re-reads
    _LIN_TILES = dict(block_m=512, block_n=512, block_k=1024)
    _ATTN_TILES = dict(block_q=512, block_kv=1024)
else:               # v7x (64 MiB VMEM per TC): re-derived, smaller working set
    _LIN_TILES = dict(block_m=256, block_n=256, block_k=512)
    _ATTN_TILES = dict(block_q=256, block_kv=512)


def _sublane_align(dtype):
    """Sublane alignment: 16 rows for 2-byte dtypes (bf16 packing), else 8."""
    return 16 if jnp.dtype(dtype).itemsize == 2 else 8


def _pick_tile(dim, cap, align):
    """Largest tile <= cap that divides `dim` and is a multiple of `align`.

    Falls back to the full dimension (always legal: block == full array dim).
    """
    if dim <= cap:
        return dim
    t = (cap // align) * align
    while t >= align:
        if dim % t == 0:
            return t
        t -= align
    return dim


# ---------------------------------------------------------------------------
# Tiled linear (matmul + bias) kernel: used for both Wqkv and out_proj.
# ---------------------------------------------------------------------------
def _linear_kernel(x_ref, w_ref, b_ref, o_ref, acc_ref):
    k = pl.program_id(2)

    @pl.when(k == 0)
    def _init():
        acc_ref[...] = jnp.zeros_like(acc_ref)

    acc_ref[...] += jnp.dot(x_ref[...], w_ref[...],
                            preferred_element_type=jnp.float32)

    @pl.when(k == pl.num_programs(2) - 1)
    def _finalize():
        o_ref[...] = (acc_ref[...] + b_ref[...]).astype(o_ref.dtype)


def linear_projection(x2d, w, b, *, block_m=None, block_n=None, block_k=None):
    """y = x2d @ w + b, tiled over (M, N, K) with an f32 VMEM accumulator."""
    M, K = x2d.shape
    Kw, N = w.shape
    assert K == Kw and b.shape == (N,)
    block_m = _LIN_TILES["block_m"] if block_m is None else block_m
    block_n = _LIN_TILES["block_n"] if block_n is None else block_n
    block_k = _LIN_TILES["block_k"] if block_k is None else block_k

    m_align = _sublane_align(x2d.dtype)
    tm = _pick_tile(M, block_m, m_align)
    tn = _pick_tile(N, block_n, 128)
    tk = _pick_tile(K, block_k, 128)
    # v7x megacore: keep >= 2 parallel output tiles when the shape allows it.
    while ((M // tm) * (N // tn) < 2 and tm % 2 == 0
           and (tm // 2) % m_align == 0 and M % (tm // 2) == 0):
        tm //= 2

    grid = (M // tm, N // tn, K // tk)
    return pl.pallas_call(
        _linear_kernel,
        out_shape=jax.ShapeDtypeStruct((M, N), x2d.dtype),
        grid=grid,
        in_specs=[
            pl.BlockSpec((tm, tk), lambda i, j, k: (i, k)),
            pl.BlockSpec((tk, tn), lambda i, j, k: (k, j)),
            pl.BlockSpec((1, tn), lambda i, j, k: (0, j)),
        ],
        out_specs=pl.BlockSpec((tm, tn), lambda i, j, k: (i, j)),
        scratch_shapes=[pltpu.VMEM((tm, tn), jnp.float32)],
        compiler_params=pltpu.CompilerParams(
            dimension_semantics=("parallel", "parallel", "arbitrary"),
            vmem_limit_bytes=_VMEM_LIMIT_BYTES,
        ),
    )(x2d, w, b.reshape(1, N))


# ---------------------------------------------------------------------------
# Flash (online-softmax) attention over the all-gathered K/V.
# ---------------------------------------------------------------------------
def _flash_attn_kernel(q_ref, k_ref, v_ref, o_ref, q_scr, m_ref, l_ref, acc_ref,
                       *, scale, num_heads, head_dim, heads_per_group):
    # q_ref          : [1, tq, C]   Q lanes only (head h occupies lanes [h*Dh,(h+1)*Dh))
    # k_ref / v_ref  : [1, tkv, C]  all-gathered K / V tiles
    # o_ref          : [1, tq, C]   merged-head context (single lane-dense store)
    # q_scr          : [tq, C]      Q * scale, staged once per q tile (input dtype)
    # m_ref / l_ref  : [H, tq, 1]   f32 running max / denominator
    # acc_ref        : [tq, C]      f32 un-normalized context accumulator
    #
    # NOTE: the KV grid axis MUST stay the innermost axis and be "arbitrary":
    # m/l/acc carry across it and the output is written only on its last step.
    kv_idx = pl.program_id(2)
    group_width = heads_per_group * head_dim
    num_groups = num_heads // heads_per_group

    @pl.when(kv_idx == 0)
    def _init():
        # Softmax scale folded into Q once per q tile (not per KV step).
        q_scr[...] = (q_ref[0] * scale).astype(q_scr.dtype)
        m_ref[...] = jnp.full_like(m_ref, -jnp.inf)
        l_ref[...] = jnp.zeros_like(l_ref)
        acc_ref[...] = jnp.zeros_like(acc_ref)

    def process_group(g, cols):
        q_grp = q_scr[:, cols]        # [tq,  GW]
        k_grp = k_ref[0, :, cols]     # [tkv, GW]
        v_grp = v_ref[0, :, cols]     # [tkv, GW]
        pv_parts, alpha_parts = [], []
        for j in range(heads_per_group):
            h = g * heads_per_group + j
            sl = slice(j * head_dim, (j + 1) * head_dim)
            # S = Q K^T via NT dot_general (contract Dh axes, no K transpose).
            # NOTE: Dh=64 underfills the 256-wide MXU on v6e/v7x; prefer
            # head_dim=128 at the model level when possible.
            s = lax.dot_general(q_grp[:, sl], k_grp[:, sl],
                                (((1,), (1,)), ((), ())),
                                preferred_element_type=jnp.float32)   # [tq, tkv]
            m_prev = m_ref[h]                                         # [tq, 1]
            m_new = jnp.maximum(m_prev, jnp.max(s, axis=-1, keepdims=True))
            alpha = jnp.exp(m_prev - m_new)
            p = jnp.exp(s - m_new)                                    # [tq, tkv]
            l_ref[h] = alpha * l_ref[h] + jnp.sum(p, axis=-1, keepdims=True)
            m_ref[h] = m_new
            pv = lax.dot_general(p.astype(v_grp.dtype), v_grp[:, sl],
                                 (((1,), (0,)), ((), ())),
                                 preferred_element_type=jnp.float32)  # [tq, Dh]
            pv_parts.append(pv)
            alpha_parts.append(jnp.broadcast_to(alpha, (alpha.shape[0], head_dim)))
        if heads_per_group == 1:
            pv_grp, alpha_grp = pv_parts[0], alpha_parts[0]
        else:
            pv_grp = jnp.concatenate(pv_parts, axis=1)                # [tq, GW]
            alpha_grp = jnp.concatenate(alpha_parts, axis=1)          # [tq, GW]
        # Lane-dense accumulator RMW (GW = 128 lanes for Dh in {8,16,32,64,128}).
        acc_ref[:, cols] = alpha_grp * acc_ref[:, cols] + pv_grp

    if num_groups <= 4:
        # Small head counts: static unroll (full LLO scheduler visibility).
        for g in range(num_groups):
            process_group(g, pl.ds(g * group_width, group_width))
    else:
        # Realistic head counts: bound vreg live ranges to avoid spills.
        def body(g, carry):
            col0 = pl.multiple_of(g * group_width, group_width)
            process_group(g, pl.ds(col0, group_width))
            return carry
        lax.fori_loop(0, num_groups, body, 0, unroll=2)

    @pl.when(kv_idx == pl.num_programs(2) - 1)
    def _finalize():
        # Normalization runs once per output tile; build a group-wide inverse
        # denominator so the multiplies/stores stay lane-dense.
        for g in range(num_groups):
            cols = pl.ds(g * group_width, group_width)
            parts = []
            for j in range(heads_per_group):
                inv_l = pl.reciprocal(l_ref[g * heads_per_group + j], approx=False)
                parts.append(jnp.broadcast_to(inv_l, (inv_l.shape[0], head_dim)))
            inv_grp = parts[0] if heads_per_group == 1 else jnp.concatenate(parts, axis=1)
            acc_ref[:, cols] = acc_ref[:, cols] * inv_grp
        # Single lane-dense store of width C (heads already merged).
        o_ref[0] = acc_ref[...].astype(o_ref.dtype)


def flash_attention(qkv_local, k_all, v_all, *, num_heads,
                    block_q=None, block_kv=None):
    B, Nq, C3 = qkv_local.shape
    assert C3 % 3 == 0
    C = C3 // 3
    assert C % num_heads == 0
    head_dim = C // num_heads
    assert head_dim % 8 == 0 and head_dim <= 128, "module constraint on head_dim"
    assert k_all.shape == v_all.shape and k_all.shape[0] == B and k_all.shape[2] == C
    Nk = k_all.shape[1]
    scale = head_dim ** (-0.5)

    block_q = _ATTN_TILES["block_q"] if block_q is None else block_q
    block_kv = _ATTN_TILES["block_kv"] if block_kv is None else block_kv

    q_align = _sublane_align(qkv_local.dtype)
    tq = _pick_tile(Nq, block_q, q_align)
    tkv = _pick_tile(Nk, block_kv, 128)       # lane-aligned KV tile
    # v7x megacore: keep >= 2 parallel (b, q-tile) units when the shape allows.
    while (B * (Nq // tq) < 2 and tq % 2 == 0
           and (tq // 2) % q_align == 0 and Nq % (tq // 2) == 0):
        tq //= 2
    grid = (B, Nq // tq, Nk // tkv)

    # Group heads so the accumulator RMW spans full 128-lane slabs
    # (Dh=64 -> 2 heads per group, Dh=128 -> 1).
    heads_per_group = 1
    if 128 % head_dim == 0:
        hpg = 128 // head_dim
        while hpg > 1 and num_heads % hpg:
            hpg //= 2
        heads_per_group = hpg

    if C % 128 == 0:
        # Q lanes are lane-block 0 of the fused [B, N, 3C] tensor: DMA only
        # them (3x less Q-side HBM traffic / VMEM than the full QKV tile).
        q_in = qkv_local
    else:
        # TODO(synk): fallback materializes a Q copy in HBM; production dims
        # (C a multiple of 128) take the zero-copy lane-block path above.
        q_in = qkv_local[:, :, :C]

    kernel = functools.partial(_flash_attn_kernel, scale=scale,
                               num_heads=num_heads, head_dim=head_dim,
                               heads_per_group=heads_per_group)
    # TODO(synk): if profiling shows exposed KV DMA on v6e, add
    # pipeline_mode=pl.Buffered(3) to the K/V BlockSpecs (skip on v7x: VMEM).
    return pl.pallas_call(
        kernel,
        out_shape=jax.ShapeDtypeStruct((B, Nq, C), qkv_local.dtype),
        grid=grid,
        in_specs=[
            pl.BlockSpec((1, tq, C), lambda b, qi, kj: (b, qi, 0)),
            pl.BlockSpec((1, tkv, C), lambda b, qi, kj: (b, kj, 0)),
            pl.BlockSpec((1, tkv, C), lambda b, qi, kj: (b, kj, 0)),
        ],
        out_specs=pl.BlockSpec((1, tq, C), lambda b, qi, kj: (b, qi, 0)),
        scratch_shapes=[
            pltpu.VMEM((tq, C), qkv_local.dtype),           # staged, pre-scaled Q
            pltpu.VMEM((num_heads, tq, 1), jnp.float32),    # running max
            pltpu.VMEM((num_heads, tq, 1), jnp.float32),    # running denom
            pltpu.VMEM((tq, C), jnp.float32),               # un-normalized acc
        ],
        compiler_params=pltpu.CompilerParams(
            dimension_semantics=("parallel", "parallel", "arbitrary"),
            vmem_limit_bytes=_VMEM_LIMIT_BYTES,
        ),
    )(q_in, k_all, v_all)


# ---------------------------------------------------------------------------
# Sequence-parallel forward (per-rank)
# ---------------------------------------------------------------------------
def local_qkv(x_local, params):
    """This rank's fused QKV projection, kept as [B, N_local, 3C]."""
    B, N_local, C = x_local.shape
    qkv2d = linear_projection(x_local.reshape(B * N_local, C),
                              params["w_qkv"], params["b_qkv"])
    return qkv2d.reshape(B, N_local, 3 * C)


def attention_sp_forward(qkv_local, k_all, v_all, params, num_heads,
                         *, block_q=None, block_kv=None):
    """Attention over all-gathered K/V + output projection for one rank."""
    B, N_local, C3 = qkv_local.shape
    C = C3 // 3
    ctx = flash_attention(qkv_local, k_all, v_all, num_heads=num_heads,
                          block_q=block_q, block_kv=block_kv)   # [B, N_local, C]
    out = linear_projection(ctx.reshape(B * N_local, C),
                            params["w_proj"], params["b_proj"])
    return out.reshape(B, N_local, C)


def sp_forward_emulated(x_global, params, num_heads, world_size,
                        *, block_q=None, block_kv=None):
    """Full sequence-parallel forward with an in-process emulated all-gather."""
    B, N_total, C = x_global.shape
    assert N_total % world_size == 0
    N_local = N_total // world_size
    x_locals = [x_global[:, r * N_local:(r + 1) * N_local, :]
                for r in range(world_size)]
    # Each rank computes its local fused QKV projection (Pallas).
    qkv_locals = [local_qkv(xl, params) for xl in x_locals]
    # Emulated sp_all_gather of K and V along the sequence axis (plain-JAX glue).
    k_all = jnp.concatenate([q3[:, :, C:2 * C] for q3 in qkv_locals], axis=1)
    v_all = jnp.concatenate([q3[:, :, 2 * C:] for q3 in qkv_locals], axis=1)
    outs = [attention_sp_forward(q3, k_all, v_all, params, num_heads,
                                 block_q=block_q, block_kv=block_kv)
            for q3 in qkv_locals]
    return jnp.concatenate(outs, axis=1)


# ---------------------------------------------------------------------------
# Plain-JAX reference for verification
# ---------------------------------------------------------------------------
def reference_forward(x_global, params, num_heads):
    B, N, C = x_global.shape
    Dh = C // num_heads
    scale = Dh ** (-0.5)
    qkv = x_global @ params["w_qkv"] + params["b_qkv"]
    qkv = qkv.reshape(B, N, 3, num_heads, Dh)
    q = jnp.transpose(qkv[:, :, 0], (0, 2, 1, 3))   # [B, H, N, Dh]
    k = jnp.transpose(qkv[:, :, 1], (0, 2, 1, 3))
    v = jnp.transpose(qkv[:, :, 2], (0, 2, 1, 3))
    attn = (q * scale) @ jnp.swapaxes(k, -2, -1)
    attn = jax.nn.softmax(attn, axis=-1)
    o = attn @ v
    o = jnp.transpose(o, (0, 2, 1, 3)).reshape(B, N, C)
    return o @ params["w_proj"] + params["b_proj"]


# ---------------------------------------------------------------------------
# Main
# ---------------------------------------------------------------------------
if __name__ == "__main__":
    B = 2
    num_heads = 2
    head_dim = 64                      # module requires head_dim % 8 == 0, <= 128
    C = num_heads * head_dim           # 128
    WORLD_SIZE = 2
    N_local = 128
    N_total = N_local * WORLD_SIZE     # 256

    key = jax.random.PRNGKey(0)
    k_x, k_qw, k_qb, k_pw, k_pb = jax.random.split(key, 5)

    def bf16_exact(a):
        # Round to bf16 and back so both precision paths start from identical values.
        return a.astype(jnp.bfloat16).astype(jnp.float32)

    x_global = bf16_exact(jax.random.normal(k_x, (B, N_total, C), jnp.float32))
    params = {
        "w_qkv": bf16_exact(jax.random.normal(k_qw, (C, 3 * C), jnp.float32) * 0.05),
        "b_qkv": bf16_exact(jax.random.normal(k_qb, (3 * C,), jnp.float32) * 0.05),
        "w_proj": bf16_exact(jax.random.normal(k_pw, (C, C), jnp.float32) * 0.05),
        "b_proj": bf16_exact(jax.random.normal(k_pb, (C,), jnp.float32) * 0.05),
    }

    ref = reference_forward(x_global, params, num_heads)

    # (1) f32 run with deliberately small attention tiles so the demo exercises
    #     multi-step online softmax and multiple q tiles.  These are NOT the
    #     production tiles (generation-tuned defaults are used below).
    out_f32 = sp_forward_emulated(x_global, params, num_heads, WORLD_SIZE,
                                  block_q=64, block_kv=128)
    out_f32 = jax.block_until_ready(out_f32)
    assert out_f32.shape == (B, N_total, C)
    err_f32 = float(jnp.max(jnp.abs(out_f32 - ref)))
    assert jnp.allclose(out_f32, ref, atol=5e-3, rtol=5e-3), \
        f"f32 mismatch vs reference, max abs err = {err_f32}"

    # (2) bf16 production-policy run (mirrors the module's half-precision
    #     attention; bf16 is the native MXU input dtype) with the
    #     generation-tuned default tiles.  Accumulation stays f32 in-kernel.
    x_bf16 = x_global.astype(jnp.bfloat16)
    params_bf16 = {k: v.astype(jnp.bfloat16) for k, v in params.items()}
    out_bf16 = sp_forward_emulated(x_bf16, params_bf16, num_heads, WORLD_SIZE)
    out_bf16 = jax.block_until_ready(out_bf16).astype(jnp.float32)
    err_bf16 = float(jnp.max(jnp.abs(out_bf16 - ref)))
    assert jnp.allclose(out_bf16, ref, atol=8e-2, rtol=8e-2), \
        f"bf16 mismatch vs reference, max abs err = {err_bf16}"

    print("KERNEL_OK")
</pallas_src>

<mosaic_0001>
module attributes {stable_mosaic.version = 11 : i64} {
  func.func @_linear_kernel(%arg0: i32, %arg1: i32, %arg2: i32, %arg3: memref<256x128xf32, #tpu.memory_space<vmem>>, %arg4: memref<128x128xf32, #tpu.memory_space<vmem>>, %arg5: memref<1x128xf32, #tpu.memory_space<vmem>>, %arg6: memref<256x128xf32, #tpu.memory_space<vmem>>, %arg7: memref<256x128xf32, #tpu.memory_space<vmem>>) attributes {dimension_semantics = [#tpu.dimension_semantics<parallel>, #tpu.dimension_semantics<parallel>, #tpu.dimension_semantics<arbitrary>], iteration_bounds = array<i64: 1, 3, 1>, scalar_prefetch = 0 : i64, scratch_operands = 1 : i64, tpu.core_type = #tpu.core_type<tc>, window_params = [{transform_indices = @transform_0, window_bounds = array<i64: 256, 128>}, {transform_indices = @transform_1, window_bounds = array<i64: 128, 128>}, {transform_indices = @transform_2, window_bounds = array<i64: 1, 128>}, {transform_indices = @transform_3, window_bounds = array<i64: 256, 128>}]} {
    %c0_i32 = arith.constant 0 : i32
    %0 = arith.cmpi eq, %arg2, %c0_i32 : i32
    %1 = arith.extui %0 : i1 to i32
    %c0_i32_0 = arith.constant 0 : i32
    %2 = arith.cmpi ne, %1, %c0_i32_0 : i32
    scf.if %2 {
      %cst_10 = arith.constant 0.000000e+00 : f32
      %12 = vector.broadcast %cst_10 : f32 to vector<256x128xf32>
      %c0_11 = arith.constant 0 : index
      %c0_12 = arith.constant 0 : index
      %13 = vector.load %arg7[%c0_11, %c0_12] : memref<256x128xf32, #tpu.memory_space<vmem>>, vector<256x128xf32>
      tpu.vector_store %arg7[%c0_11, %c0_12], %12 {strides = array<i32>} : memref<256x128xf32, #tpu.memory_space<vmem>>, vector<256x128xf32>,
    } else {
    }
    %c0 = arith.constant 0 : index
    %c0_1 = arith.constant 0 : index
    %3 = vector.load %arg7[%c0, %c0_1] : memref<256x128xf32, #tpu.memory_space<vmem>>, vector<256x128xf32>
    %c0_2 = arith.constant 0 : index
    %c0_3 = arith.constant 0 : index
    %4 = vector.load %arg3[%c0_2, %c0_3] : memref<256x128xf32, #tpu.memory_space<vmem>>, vector<256x128xf32>
    %c0_4 = arith.constant 0 : index
    %c0_5 = arith.constant 0 : index
    %5 = vector.load %arg4[%c0_4, %c0_5] : memref<128x128xf32, #tpu.memory_space<vmem>>, vector<128x128xf32>
    %cst = arith.constant dense<0.000000e+00> : vector<256x128xf32>
    %6 = tpu.matmul %4, %5, %cst {dimension_numbers = #tpu.dot_dimension_numbers<[1], [0], [0], [1], [0, 0, 1, 1], [], []>} : vector<256x128xf32>, vector<128x128xf32>, vector<256x128xf32> -> vector<256x128xf32>
    %7 = arith.addf %3, %6 : vector<256x128xf32>
    %c0_6 = arith.constant 0 : index
    %c0_7 = arith.constant 0 : index
    %8 = vector.load %arg7[%c0_6, %c0_7] : memref<256x128xf32, #tpu.memory_space<vmem>>, vector<256x128xf32>
    tpu.vector_store %arg7[%c0_6, %c0_7], %7 {strides = array<i32>} : memref<256x128xf32, #tpu.memory_space<vmem>>, vector<256x128xf32>,
    %c0_i32_8 = arith.constant 0 : i32
    %9 = arith.cmpi eq, %arg2, %c0_i32_8 : i32
    %10 = arith.extui %9 : i1 to i32
    %c0_i32_9 = arith.constant 0 : i32
    %11 = arith.cmpi ne, %10, %c0_i32_9 : i32
    scf.if %11 {
      %c0_10 = arith.constant 0 : index
      %c0_11 = arith.constant 0 : index
      %12 = vector.load %arg7[%c0_10, %c0_11] : memref<256x128xf32, #tpu.memory_space<vmem>>, vector<256x128xf32>
      %c0_12 = arith.constant 0 : index
      %c0_13 = arith.constant 0 : index
      %13 = vector.load %arg5[%c0_12, %c0_13] : memref<1x128xf32, #tpu.memory_space<vmem>>, vector<1x128xf32>
      %14 = vector.broadcast %13 : vector<1x128xf32> to vector<256x128xf32>
      %15 = arith.addf %12, %14 : vector<256x128xf32>
      %c0_14 = arith.constant 0 : index
      %c0_15 = arith.constant 0 : index
      %16 = vector.load %arg6[%c0_14, %c0_15] : memref<256x128xf32, #tpu.memory_space<vmem>>, vector<256x128xf32>
      tpu.vector_store %arg6[%c0_14, %c0_15], %15 {strides = array<i32>} : memref<256x128xf32, #tpu.memory_space<vmem>>, vector<256x128xf32>,
    } else {
    }
    return
  }
  func.func @transform_0(%arg0: i32, %arg1: i32, %arg2: i32) -> (i32, i32) {
    %c0_i32 = arith.constant 0 : i32
    return %arg0, %arg2 : i32, i32
  }
  func.func @transform_1(%arg0: i32, %arg1: i32, %arg2: i32) -> (i32, i32) {
    %c0_i32 = arith.constant 0 : i32
    return %arg2, %arg1 : i32, i32
  }
  func.func @transform_2(%arg0: i32, %arg1: i32, %arg2: i32) -> (i32, i32) {
    %c0_i32 = arith.constant 0 : i32
    %c0_i32_0 = arith.constant 0 : i32
    return %c0_i32, %arg1 : i32, i32
  }
  func.func @transform_3(%arg0: i32, %arg1: i32, %arg2: i32) -> (i32, i32) {
    %c0_i32 = arith.constant 0 : i32
    return %arg0, %arg1 : i32, i32
  }
}

</mosaic_0001>

<llo_original>
// kernel: tpu_custom_call.1
$region0: #{tpu_custom_call.1}
  #allocation0 [shape = 'u32[]', space=smem, size = 0x4, offset = 0x4, fixed_abs, tag = 'smem constant byte address 0x4 - core index']
  #allocation1 [shape = 'u32[144,128]{1,0:T(1,128)}', space=vmem, size = 0x12000, scoped, tag = 'internal scratch']
  #allocation2 [shape = 'f32[256,128]{1,0:T(8,128)}', space=vmem, size = 0x20000, scoped, tag = 'scratch operand']
  %s0 = inlined_call_operand.hbm [shape: f32[256,128], index: 0, kind: input, shape index: {}]
  %s1 = inlined_call_operand.hbm [shape: f32[128,384], index: 1, kind: input, shape index: {}]
  %s2 = inlined_call_operand.vmem [shape: f32[1,384], index: 2, kind: input, shape index: {}]
  %s3 = inlined_call_operand.hbm [shape: f32[256,384], index: 3, kind: output, shape index: {}]
  %s4 = sld [smem:[#allocation0]]
  $region61: #{tpu_custom_call.1} parent=0
    _
  %s6 = ssub.s32 1, %s4
  %s7 = scalar_select 0, %s6, %s4
  $region1: #{tpu_custom_call.1} parent=0
    #allocation3 [shape = 'u8[131072]{0}', space=vmem, size = 0x20000, scoped, tag = 'input window, operand 0, single buffered']
    #allocation4 [shape = 's32[2]{0}', space=sflag, size = 0x8, scoped, tag = 'scoped memory for tpu_custom_call.1']
    #allocation5 [shape = 's32[2]{0}', space=sflag, size = 0x8, scoped, tag = 'scoped memory for tpu_custom_call.1']
    #allocation6 [shape = 'u8[131072]{0}', space=vmem, size = 0x20000, scoped, tag = 'input window, operand 1']
    #allocation7 [shape = 's32[2]{0}', space=sflag, size = 0x8, scoped, tag = 'scoped memory for tpu_custom_call.1']
    #allocation8 [shape = 'u8[262144]{0}', space=vmem, size = 0x40000, scoped, tag = 'output window, operand 0']
    %8 = vsyncpa [#allocation4], 0
    %9 = vsyncpa [#allocation7], 0
    %s10 = scalar_lea.sflag [#allocation7], 1
    %11 = vsyncpa %s10, 0
    %12 = vsyncpa [#allocation5], 0
    %s13 = scalar_lea.sflag [#allocation5], 1
    %14 = vsyncpa %s13, 0
    loop: start=0, step=1, limit=5
    $region2: #{tpu_custom_call.1} parent=1 // loop_pre_header
      _
    $region3: #{tpu_custom_call.1} parent=1 // loop_header
      %s16 = sphi 0, %s20
      %p17 = scmp.ge.s32.totalorder %s16, 5
      %s23 = sphi 0, %s42
      %s24 = sphi 0, %s38
      %s25 = sphi 0, %s34
      %s26 = sphi 0, %s23
      %s27 = sphi 0, %s24
      %s28 = sphi 0, %s25
      %s29 = sphi 0, %s26
      %s30 = sphi 0, %s27
      %s31 = sphi 0, %s28
      %s47 = sphi 0, %s49
      %s50 = sphi 0, %s47
      %s51 = sphi 0, %s50
      %s67 = sphi 0, %s51
      %s75 = sphi 0, %s77
      %s78 = sphi 0, %s75
      %s79 = sphi 0, %s78
      %s95 = sphi 0, %s79
      %s101 = sphi 0, %s103
      %s104 = sphi 0, %s101
      %s105 = sphi 0, %s104
      %s121 = sphi 0, %s105
      %s129 = sphi 0, %s131
      %s132 = sphi 0, %s129
      %s133 = sphi 0, %s132
      %s149 = sphi 0, %s133
    $region4: #{tpu_custom_call.1} parent=1 // loop_header_branch
      %19 = sbr.rel (%p17) target = $region8
    $region5: #{tpu_custom_call.1} parent=1 // loop_body
      %s21 = ssub.s32 %s16, 1
      %s22 = ssub.s32 %s16, 2
      %s32 = sadd.s32 1, %s25
      %p33 = scmp.ge.s32.totalorder %s32, 1
      %s34 = scalar_select %p33, 0, %s32
      %s35 = sadd.s32 1, %s24
      %s36 = scalar_select %p33, %s35, %s24
      %p37 = scmp.ge.s32.totalorder %s36, 3
      %s38 = scalar_select %p37, 0, %s36
      %s39 = sadd.s32 1, %s23
      %s40 = scalar_select %p37, %s39, %s23
      %p41 = scmp.ge.s32.totalorder %s40, 1
      %s42 = scalar_select %p41, 0, %s40
      %s43 = ssub.s32 %s23, %s42
      %s44 = ssub.s32 %s25, %s34
      %s45 = sor.u32 %s43, %s44
      %p46 = scmp.eq.s32.totalorder %s45, 0
      %s48 = sadd.s32 %s47, 1
      %s49 = scalar_select %p46, %s47, %s48
      %p52 = pneg %p46
      %p53 = scmp.eq.s32.totalorder %s16, 2
      %p54 = por %p52, %p53
      %p55 = scmp.ne.s32.totalorder %s47, %s50
      %p56 = scmp.eq.s32.totalorder %s16, 0
      %p57 = por %p55, %p56
      %p58 = scmp.ne.s32.totalorder %s47, %s50
      %p59 = scmp.eq.s32.totalorder %s21, 2
      %p60 = por %p58, %p59
      %p61 = scmp.ne.s32.totalorder %s50, %s51
      %p62 = scmp.eq.s32.totalorder %s21, 0
      %p63 = por %p61, %p62
      %p64 = scmp.ne.s32.totalorder %s50, %s51
      %p65 = scmp.eq.s32.totalorder %s22, 2
      %p66 = por %p64, %p65
      %p68 = scmp.ne.s32.totalorder %s51, %s67
      %p69 = scmp.eq.s32.totalorder %s22, 0
      %p70 = por %p68, %p69
      %s71 = ssub.s32 %s25, %s34
      %s72 = ssub.s32 %s24, %s38
      %s73 = sor.u32 %s71, %s72
      %p74 = scmp.eq.s32.totalorder %s73, 0
      %s76 = sadd.s32 %s75, 1
      %s77 = scalar_select %p74, %s75, %s76
      %p80 = pneg %p74
      %p81 = scmp.eq.s32.totalorder %s16, 2
      %p82 = por %p80, %p81
      %p83 = scmp.ne.s32.totalorder %s75, %s78
      %p84 = scmp.eq.s32.totalorder %s16, 0
      %p85 = por %p83, %p84
      %p86 = scmp.ne.s32.totalorder %s75, %s78
      %p87 = scmp.eq.s32.totalorder %s21, 2
      %p88 = por %p86, %p87
      %p89 = scmp.ne.s32.totalorder %s78, %s79
      %p90 = scmp.eq.s32.totalorder %s21, 0
      %p91 = por %p89, %p90
      %p92 = scmp.ne.s32.totalorder %s78, %s79
      %p93 = scmp.eq.s32.totalorder %s22, 2
      %p94 = por %p92, %p93
      %p96 = scmp.ne.s32.totalorder %s79, %s95
      %p97 = scmp.eq.s32.totalorder %s22, 0
      %p98 = por %p96, %p97
      %s99 = ssub.s32 %s24, %s38
      %p100 = scmp.eq.s32.totalorder %s99, 0
      %s102 = sadd.s32 %s101, 1
      %s103 = scalar_select %p100, %s101, %s102
      %p106 = pneg %p100
      %p107 = scmp.eq.s32.totalorder %s16, 2
      %p108 = por %p106, %p107
      %p109 = scmp.ne.s32.totalorder %s101, %s104
      %p110 = scmp.eq.s32.totalorder %s16, 0
      %p111 = por %p109, %p110
      %p112 = scmp.ne.s32.totalorder %s101, %s104
      %p113 = scmp.eq.s32.totalorder %s21, 2
      %p114 = por %p112, %p113
      %p115 = scmp.ne.s32.totalorder %s104, %s105
      %p116 = scmp.eq.s32.totalorder %s21, 0
      %p117 = por %p115, %p116
      %p118 = scmp.ne.s32.totalorder %s104, %s105
      %p119 = scmp.eq.s32.totalorder %s22, 2
      %p120 = por %p118, %p119
      %p122 = scmp.ne.s32.totalorder %s105, %s121
      %p123 = scmp.eq.s32.totalorder %s22, 0
      %p124 = por %p122, %p123
      %s125 = ssub.s32 %s23, %s42
      %s126 = ssub.s32 %s24, %s38
      %s127 = sor.u32 %s125, %s126
      %p128 = scmp.eq.s32.totalorder %s127, 0
      %s130 = sadd.s32 %s129, 1
      %s131 = scalar_select %p128, %s129, %s130
      %p134 = pneg %p128
      %p135 = scmp.eq.s32.totalorder %s16, 2
      %p136 = por %p134, %p135
      %p137 = scmp.ne.s32.totalorder %s129, %s132
      %p138 = scmp.eq.s32.totalorder %s16, 0
      %p139 = por %p137, %p138
      %p140 = scmp.ne.s32.totalorder %s129, %s132
      %p141 = scmp.eq.s32.totalorder %s21, 2
      %p142 = por %p140, %p141
      %p143 = scmp.ne.s32.totalorder %s132, %s133
      %p144 = scmp.eq.s32.totalorder %s21, 0
      %p145 = por %p143, %p144
      %p146 = scmp.ne.s32.totalorder %s132, %s133
      %p147 = scmp.eq.s32.totalorder %s22, 2
      %p148 = por %p146, %p147
      %p150 = scmp.ne.s32.totalorder %s133, %s149
      %p151 = scmp.eq.s32.totalorder %s22, 0
      %p152 = por %p150, %p151
      %p153 = scmp.le.s32.totalorder 1, %s16
      %p154 = scmp.lt.s32.totalorder %s16, 4
      %p155 = pnand %p153, %p154
      %p156 = pneg %p155
      // Predicated region
      $region9: #{tpu_custom_call.1} parent=5 // pred_check
        _
      $region10: #{tpu_custom_call.1} parent=5 // pred_check_branch
        %158 = sbr.rel (%p155) target = $region12
      $region11: #{tpu_custom_call.1} parent=5 // pred_region
        %s159 = ssub.s32 %s16, 1
        // Predicated region
        $region13: #{tpu_custom_call.1} parent=11 // pred_check
          %p160 = pneg %p63
        $region14: #{tpu_custom_call.1} parent=11 // pred_check_branch
          %162 = sbr.rel (%p160) target = $region16
        $region15: #{tpu_custom_call.1} parent=11 // pred_region
          %s163 = smul.u32 32, %s26
          %s165 = ssub.s32 4096, 4096
          %166 = vsyncadd [#allocation4], %s165
          %s167 = sadd.s32 %s28, %s163
          %s168 = smul.addr %s167, 128
          %s169 = scalar_lea.hbm %s0, %s168
          %s170 = sshll.u32 [#allocation3], 4
          %s171 = int_to_ptr.vmem [resolvable:$true] %s170
          %176 = dma.hbm_to_vmem [thread:$0]  %s169, 4096, %s171, [#allocation4], 128, 128, 8
        $region16: #{tpu_custom_call.1} parent=11 // pred_fallthru
          _
      $region12: #{tpu_custom_call.1} parent=5 // pred_fallthru
        _
      %p177 = scmp.lt.s32.totalorder %s16, 3
      // Predicated region
      $region17: #{tpu_custom_call.1} parent=5 // pred_check
        %p178 = pneg %p177
      $region18: #{tpu_custom_call.1} parent=5 // pred_check_branch
        %180 = sbr.rel (%p178) target = $region20
      $region19: #{tpu_custom_call.1} parent=5 // pred_region
        // Predicated region
        $region21: #{tpu_custom_call.1} parent=19 // pred_check
          %p181 = pneg %p85
        $region22: #{tpu_custom_call.1} parent=19 // pred_check_branch
          %183 = sbr.rel (%p181) target = $region24
        $region23: #{tpu_custom_call.1} parent=19 // pred_region
          %s184 = sand.u32 %s75, 1
          %s185 = scalar_lea.sflag [#allocation7], %s184
          %s186 = sand.u32 %s75, 1
          %s187 = smul.addr %s186, 128
          %s188 = scalar_lea.vmem [#allocation6], %s187
          %s189 = smul.u32 16, %s25
          %s191 = ssub.s32 2048, 2048
          %192 = vsyncadd %s185, %s191
          %s193 = smul.addr %s189, 3
          %s194 = sadd.s32 %s24, %s193
          %s195 = smul.addr %s194, 128
          %s196 = scalar_lea.hbm %s1, %s195
          %s197 = sshll.u32 %s188, 4
          %s198 = int_to_ptr.vmem [resolvable:$true] %s197
          %203 = dma.hbm_to_vmem [thread:$0]  %s196, 2048, %s198, %s185, 384, 128, 8
        $region24: #{tpu_custom_call.1} parent=19 // pred_fallthru
          _
        // Predicated region
        $region25: #{tpu_custom_call.1} parent=19 // pred_check
          %p204 = pneg %p111
        $region26: #{tpu_custom_call.1} parent=19 // pred_check_branch
          %206 = sbr.rel (%p204) target = $region28
        $region27: #{tpu_custom_call.1} parent=19 // pred_region
          %p207 = scmp.lt.s32.totalorder %s24, 2
          %s208 = scalar_select %p207, %s24, 2
          %s209 = scalar_lea.vmem %s2, %s208
        $region28: #{tpu_custom_call.1} parent=19 // pred_fallthru
          _
      $region20: #{tpu_custom_call.1} parent=5 // pred_fallthru
        _
      %p210 = scmp.le.s32.totalorder 1, %s16
      %p211 = scmp.lt.s32.totalorder %s16, 4
      %p212 = pnand %p210, %p211
      %p213 = pneg %p212
      // Predicated region
      $region29: #{tpu_custom_call.1} parent=5 // pred_check
        _
      $region30: #{tpu_custom_call.1} parent=5 // pred_check_branch
        %215 = sbr.rel (%p212) target = $region32
      $region31: #{tpu_custom_call.1} parent=5 // pred_region
        %s216 = ssub.s32 %s16, 1
        // Predicated region
        $region33: #{tpu_custom_call.1} parent=31 // pred_check
          %p217 = pneg %p63
        $region34: #{tpu_custom_call.1} parent=31 // pred_check_branch
          %219 = sbr.rel (%p217) target = $region36
        $region35: #{tpu_custom_call.1} parent=31 // pred_region
          %220 = dma.done [#allocation4], 4096
        $region36: #{tpu_custom_call.1} parent=31 // pred_fallthru
          _
        %s221 = sand.u32 %s78, 1
        %s222 = scalar_lea.sflag [#allocation7], %s221
        %s223 = sand.u32 %s78, 1
        %s224 = smul.addr %s223, 128
        %s225 = scalar_lea.vmem [#allocation6], %s224
        // Predicated region
        $region37: #{tpu_custom_call.1} parent=31 // pred_check
          %p226 = pneg %p91
        $region38: #{tpu_custom_call.1} parent=31 // pred_check_branch
          %228 = sbr.rel (%p226) target = $region40
        $region39: #{tpu_custom_call.1} parent=31 // pred_region
          %229 = dma.done %s222, 2048
        $region40: #{tpu_custom_call.1} parent=31 // pred_fallthru
          _
        %p230 = pneg %p63
        %p231 = pneg %p60
        %s232 = sand.u32 %s78, 1
        %s233 = scalar_lea.sflag [#allocation7], %s232
        %s234 = sand.u32 %s78, 1
        %s235 = smul.addr %s234, 128
        %s236 = scalar_lea.vmem [#allocation6], %s235
        %p237 = pneg %p91
        %p238 = pneg %p88
        %p239 = scmp.lt.s32.totalorder %s27, 2
        %s240 = scalar_select %p239, %s27, 2
        %s241 = scalar_lea.vmem %s2, %s240
        %p242 = pneg %p117
        %p243 = pneg %p114
        %p244 = pneg %p145
        %p245 = pneg %p142
        %s246 = sand.u32 %s132, 1
        %s247 = scalar_lea.sflag [#allocation5], %s246
        %s248 = sand.u32 %s132, 1
        %s249 = smul.addr %s248, 256
        %s250 = scalar_lea.vmem [#allocation8], %s249
        %s251 = smul.u32 32, %s26
        %s252 = smul.u32 16, %s28
        %p253 = scmp.lt.s32.totalorder %s27, 2
        %s254 = scalar_select %p253, %s27, 2
        %s255 = scalar_lea.vmem %s2, %s254
        %s256 = smul.u32 32, %s26
        %p257 = scmp.eq.s32.totalorder %s28, 0
        // Predicated region
        $region41: #{tpu_custom_call.1} parent=31 // pred_check
          %p258 = pneg %p257
        $region42: #{tpu_custom_call.1} parent=31 // pred_check_branch
          %260 = sbr.rel (%p258) target = $region44
        $region43: #{tpu_custom_call.1} parent=31 // pred_region
          %261 = vst [vmem:[#allocation2] sm:$0xff] 0.0
          %262 = vst [vmem:[#allocation2 + $0x8] sm:$0xff] 0.0
          %263 = vst [vmem:[#allocation2 + $0x10] sm:$0xff] 0.0
          %264 = vst [vmem:[#allocation2 + $0x18] sm:$0xff] 0.0
          %265 = vst [vmem:[#allocation2 + $0x20] sm:$0xff] 0.0
          %266 = vst [vmem:[#allocation2 + $0x28] sm:$0xff] 0.0
          %267 = vst [vmem:[#allocation2 + $0x30] sm:$0xff] 0.0
          %268 = vst [vmem:[#allocation2 + $0x38] sm:$0xff] 0.0
          %269 = vst [vmem:[#allocation2 + $0x40] sm:$0xff] 0.0
          %270 = vst [vmem:[#allocation2 + $0x48] sm:$0xff] 0.0
          %271 = vst [vmem:[#allocation2 + $0x50] sm:$0xff] 0.0
          %272 = vst [vmem:[#allocation2 + $0x58] sm:$0xff] 0.0
          %273 = vst [vmem:[#allocation2 + $0x60] sm:$0xff] 0.0
          %274 = vst [vmem:[#allocation2 + $0x68] sm:$0xff] 0.0
          %275 = vst [vmem:[#allocation2 + $0x70] sm:$0xff] 0.0
          %276 = vst [vmem:[#allocation2 + $0x78] sm:$0xff] 0.0
          %277 = vst [vmem:[#allocation2 + $0x80] sm:$0xff] 0.0
          %278 = vst [vmem:[#allocation2 + $0x88] sm:$0xff] 0.0
          %279 = vst [vmem:[#allocation2 + $0x90] sm:$0xff] 0.0
          %280 = vst [vmem:[#allocation2 + $0x98] sm:$0xff] 0.0
          %281 = vst [vmem:[#allocation2 + $0xa0] sm:$0xff] 0.0
          %282 = vst [vmem:[#allocation2 + $0xa8] sm:$0xff] 0.0
          %283 = vst [vmem:[#allocation2 + $0xb0] sm:$0xff] 0.0
          %284 = vst [vmem:[#allocation2 + $0xb8] sm:$0xff] 0.0
          %285 = vst [vmem:[#allocation2 + $0xc0] sm:$0xff] 0.0
          %286 = vst [vmem:[#allocation2 + $0xc8] sm:$0xff] 0.0
          %287 = vst [vmem:[#allocation2 + $0xd0] sm:$0xff] 0.0
          %288 = vst [vmem:[#allocation2 + $0xd8] sm:$0xff] 0.0
          %289 = vst [vmem:[#allocation2 + $0xe0] sm:$0xff] 0.0
          %290 = vst [vmem:[#allocation2 + $0xe8] sm:$0xff] 0.0
          %291 = vst [vmem:[#allocation2 + $0xf0] sm:$0xff] 0.0
          %292 = vst [vmem:[#allocation2 + $0xf8] sm:$0xff] 0.0
        $region44: #{tpu_custom_call.1} parent=31 // pred_fallthru
          _
        %v293 = vld [vmem:[#allocation2] sm:$0xff]
        %v294 = vld [vmem:[#allocation2 + $0x8] sm:$0xff]
        %v295 = vld [vmem:[#allocation2 + $0x10] sm:$0xff]
        %v296 = vld [vmem:[#allocation2 + $0x18] sm:$0xff]
        %v297 = vld [vmem:[#allocation2 + $0x20] sm:$0xff]
        %v298 = vld [vmem:[#allocation2 + $0x28] sm:$0xff]
        %v299 = vld [vmem:[#allocation2 + $0x30] sm:$0xff]
        %v300 = vld [vmem:[#allocation2 + $0x38] sm:$0xff]
        %v301 = vld [vmem:[#allocation2 + $0x40] sm:$0xff]
        %v302 = vld [vmem:[#allocation2 + $0x48] sm:$0xff]
        %v303 = vld [vmem:[#allocation2 + $0x50] sm:$0xff]
        %v304 = vld [vmem:[#allocation2 + $0x58] sm:$0xff]
        %v305 = vld [vmem:[#allocation2 + $0x60] sm:$0xff]
        %v306 = vld [vmem:[#allocation2 + $0x68] sm:$0xff]
        %v307 = vld [vmem:[#allocation2 + $0x70] sm:$0xff]
        %v308 = vld [vmem:[#allocation2 + $0x78] sm:$0xff]
        %v309 = vld [vmem:[#allocation2 + $0x80] sm:$0xff]
        %v310 = vld [vmem:[#allocation2 + $0x88] sm:$0xff]
        %v311 = vld [vmem:[#allocation2 + $0x90] sm:$0xff]
        %v312 = vld [vmem:[#allocation2 + $0x98] sm:$0xff]
        %v313 = vld [vmem:[#allocation2 + $0xa0] sm:$0xff]
        %v314 = vld [vmem:[#allocation2 + $0xa8] sm:$0xff]
        %v315 = vld [vmem:[#allocation2 + $0xb0] sm:$0xff]
        %v316 = vld [vmem:[#allocation2 + $0xb8] sm:$0xff]
        %v317 = vld [vmem:[#allocation2 + $0xc0] sm:$0xff]
        %v318 = vld [vmem:[#allocation2 + $0xc8] sm:$0xff]
        %v319 = vld [vmem:[#allocation2 + $0xd0] sm:$0xff]
        %v320 = vld [vmem:[#allocation2 + $0xd8] sm:$0xff]
        %v321 = vld [vmem:[#allocation2 + $0xe0] sm:$0xff]
        %v322 = vld [vmem:[#allocation2 + $0xe8] sm:$0xff]
        %v323 = vld [vmem:[#allocation2 + $0xf0] sm:$0xff]
        %v324 = vld [vmem:[#allocation2 + $0xf8] sm:$0xff]
        %v325 = vld [vmem:[#allocation3] sm:$0xff]
        %v326 = vld [vmem:[#allocation3 + $0x8] sm:$0xff]
        %v327 = vld [vmem:[#allocation3 + $0x10] sm:$0xff]
        %v328 = vld [vmem:[#allocation3 + $0x18] sm:$0xff]
        %v329 = vld [vmem:[#allocation3 + $0x20] sm:$0xff]
        %v330 = vld [vmem:[#allocation3 + $0x28] sm:$0xff]
        %v331 = vld [vmem:[#allocation3 + $0x30] sm:$0xff]
        %v332 = vld [vmem:[#allocation3 + $0x38] sm:$0xff]
        %v333 = vld [vmem:[#allocation3 + $0x40] sm:$0xff]
        %v334 = vld [vmem:[#allocation3 + $0x48] sm:$0xff]
        %v335 = vld [vmem:[#allocation3 + $0x50] sm:$0xff]
        %v336 = vld [vmem:[#allocation3 + $0x58] sm:$0xff]
        %v337 = vld [vmem:[#allocation3 + $0x60] sm:$0xff]
        %v338 = vld [vmem:[#allocation3 + $0x68] sm:$0xff]
        %v339 = vld [vmem:[#allocation3 + $0x70] sm:$0xff]
        %v340 = vld [vmem:[#allocation3 + $0x78] sm:$0xff]
        %v341 = vld [vmem:[#allocation3 + $0x80] sm:$0xff]
        %v342 = vld [vmem:[#allocation3 + $0x88] sm:$0xff]
        %v343 = vld [vmem:[#allocation3 + $0x90] sm:$0xff]
        %v344 = vld [vmem:[#allocation3 + $0x98] sm:$0xff]
        %v345 = vld [vmem:[#allocation3 + $0xa0] sm:$0xff]
        %v346 = vld [vmem:[#allocation3 + $0xa8] sm:$0xff]
        %v347 = vld [vmem:[#allocation3 + $0xb0] sm:$0xff]
        %v348 = vld [vmem:[#allocation3 + $0xb8] sm:$0xff]
        %v349 = vld [vmem:[#allocation3 + $0xc0] sm:$0xff]
        %v350 = vld [vmem:[#allocation3 + $0xc8] sm:$0xff]
        %v351 = vld [vmem:[#allocation3 + $0xd0] sm:$0xff]
        %v352 = vld [vmem:[#allocation3 + $0xd8] sm:$0xff]
        %v353 = vld [vmem:[#allocation3 + $0xe0] sm:$0xff]
        %v354 = vld [vmem:[#allocation3 + $0xe8] sm:$0xff]
        %v355 = vld [vmem:[#allocation3 + $0xf0] sm:$0xff]
        %v356 = vld [vmem:[#allocation3 + $0xf8] sm:$0xff]
        %v357 = vld [vmem:[%s225] sm:$0xff]
        %v358 = vld [vmem:[%s225 + $0x8] sm:$0xff]
        %v359 = vld [vmem:[%s225 + $0x10] sm:$0xff]
        %v360 = vld [vmem:[%s225 + $0x18] sm:$0xff]
        %v361 = vld [vmem:[%s225 + $0x20] sm:$0xff]
        %v362 = vld [vmem:[%s225 + $0x28] sm:$0xff]
        %v363 = vld [vmem:[%s225 + $0x30] sm:$0xff]
        %v364 = vld [vmem:[%s225 + $0x38] sm:$0xff]
        %v365 = vld [vmem:[%s225 + $0x40] sm:$0xff]
        %v366 = vld [vmem:[%s225 + $0x48] sm:$0xff]
        %v367 = vld [vmem:[%s225 + $0x50] sm:$0xff]
        %v368 = vld [vmem:[%s225 + $0x58] sm:$0xff]
        %v369 = vld [vmem:[%s225 + $0x60] sm:$0xff]
        %v370 = vld [vmem:[%s225 + $0x68] sm:$0xff]
        %v371 = vld [vmem:[%s225 + $0x70] sm:$0xff]
        %v372 = vld [vmem:[%s225 + $0x78] sm:$0xff]
        %373 = vmatprep.subr.mxu0 0.0
        %374 = vmatpush1.msra.mxu0 %v357
        %375 = vmatprep.subr.mxu0 0.0
        %376 = vmatpush1.msra.mxu0 %v358
        %377 = vmatprep.subr.mxu0 0.0
        %378 = vmatpush1.msra.mxu0 %v359
        %379 = vmatprep.subr.mxu0 0.0
        %380 = vmatpush1.msra.mxu0 %v360
        %381 = vmatprep.subr.mxu0 0.0
        %382 = vmatpush1.msra.mxu0 %v361
        %383 = vmatprep.subr.mxu0 0.0
        %384 = vmatpush1.msra.mxu0 %v362
        %385 = vmatprep.subr.mxu0 0.0
        %386 = vmatpush1.msra.mxu0 %v363
        %387 = vmatprep.subr.mxu0 0.0
        %388 = vmatpush1.msra.mxu0 %v364
        %389 = vmatprep.subr.mxu0 0.0
        %390 = vmatpush1.msra.mxu0 %v365
        %391 = vmatprep.subr.mxu0 0.0
        %392 = vmatpush1.msra.mxu0 %v366
        %393 = vmatprep.subr.mxu0 0.0
        %394 = vmatpush1.msra.mxu0 %v367
        %395 = vmatprep.subr.mxu0 0.0
        %396 = vmatpush1.msra.mxu0 %v368
        %397 = vmatprep.subr.mxu0 0.0
        %398 = vmatpush1.msra.mxu0 %v369
        %399 = vmatprep.subr.mxu0 0.0
        %400 = vmatpush1.msra.mxu0 %v370
        %401 = vmatprep.subr.mxu0 0.0
        %402 = vmatpush1.msra.mxu0 %v371
        %403 = vmatprep.subr.mxu0 0.0
        %404 = vmatpush1.msra.mxu0 %v372
        %405 = vmatprep.subr.mxu0 0.0
        %406 = vmatpush1.msra.mxu0 0.0
        %407 = vmatprep.subr.mxu0 0.0
        %408 = vmatpush1.msra.mxu0 0.0
        %409 = vmatprep.subr.mxu0 0.0
        %410 = vmatpush1.msra.mxu0 0.0
        %411 = vmatprep.subr.mxu0 0.0
        %412 = vmatpush1.msra.mxu0 0.0
        %413 = vmatprep.subr.mxu0 0.0
        %414 = vmatpush1.msra.mxu0 0.0
        %415 = vmatprep.subr.mxu0 0.0
        %416 = vmatpush1.msra.mxu0 0.0
        %417 = vmatprep.subr.mxu0 0.0
        %418 = vmatpush1.msra.mxu0 0.0
        %419 = vmatprep.subr.mxu0 0.0
        %420 = vmatpush1.msra.mxu0 0.0
        %421 = vmatprep.subr.mxu0 0.0
        %422 = vmatpush1.msra.mxu0 0.0
        %423 = vmatprep.subr.mxu0 0.0
        %424 = vmatpush1.msra.mxu0 0.0
        %425 = vmatprep.subr.mxu0 0.0
        %426 = vmatpush1.msra.mxu0 0.0
        %427 = vmatprep.subr.mxu0 0.0
        %428 = vmatpush1.msra.mxu0 0.0
        %429 = vmatprep.subr.mxu0 0.0
        %430 = vmatpush1.msra.mxu0 0.0
        %431 = vmatprep.subr.mxu0 0.0
        %432 = vmatpush1.msra.mxu0 0.0
        %433 = vmatprep.subr.mxu0 0.0
        %434 = vmatpush1.msra.mxu0 0.0
        %435 = vmatprep.subr.mxu0 0.0
        %436 = vmatpush1.msra.mxu0 0.0
        %437 = vmatprep.mubr.f32.mxu0 0.0
        %438 = vmatmul.mubr.f32.gmra.mrb[0].mxu0 %v325
        %v439 = vpop.f32.mrb[0].mxu0
        %v440 = vadd.f32 0.0, %v439
        %v441 = vpop.f32.mrb[0].mxu0
        %442 = vmatprep.mubr.f32.mxu0 0.0
        %443 = vmatmul.mubr.f32.gmra.mrb[0].mxu0 %v326
        %v444 = vpop.f32.mrb[0].mxu0
        %v445 = vadd.f32 0.0, %v444
        %v446 = vpop.f32.mrb[0].mxu0
        %447 = vmatprep.mubr.f32.mxu0 0.0
        %448 = vmatmul.mubr.f32.gmra.mrb[0].mxu0 %v327
        %v449 = vpop.f32.mrb[0].mxu0
        %v450 = vadd.f32 0.0, %v449
        %v451 = vpop.f32.mrb[0].mxu0
        %452 = vmatprep.mubr.f32.mxu0 0.0
        %453 = vmatmul.mubr.f32.gmra.mrb[0].mxu0 %v328
        %v454 = vpop.f32.mrb[0].mxu0
        %v455 = vadd.f32 0.0, %v454
        %v456 = vpop.f32.mrb[0].mxu0
        %457 = vmatprep.mubr.f32.mxu0 0.0
        %458 = vmatmul.mubr.f32.gmra.mrb[0].mxu0 %v329
        %v459 = vpop.f32.mrb[0].mxu0
        %v460 = vadd.f32 0.0, %v459
        %v461 = vpop.f32.mrb[0].mxu0
        %462 = vmatprep.mubr.f32.mxu0 0.0
        %463 = vmatmul.mubr.f32.gmra.mrb[0].mxu0 %v330
        %v464 = vpop.f32.mrb[0].mxu0
        %v465 = vadd.f32 0.0, %v464
        %v466 = vpop.f32.mrb[0].mxu0
        %467 = vmatprep.mubr.f32.mxu0 0.0
        %468 = vmatmul.mubr.f32.gmra.mrb[0].mxu0 %v331
        %v469 = vpop.f32.mrb[0].mxu0
        %v470 = vadd.f32 0.0, %v469
        %v471 = vpop.f32.mrb[0].mxu0
        %472 = vmatprep.mubr.f32.mxu0 0.0
        %473 = vmatmul.mubr.f32.gmra.mrb[0].mxu0 %v332
        %v474 = vpop.f32.mrb[0].mxu0
        %v475 = vadd.f32 0.0, %v474
        %v476 = vpop.f32.mrb[0].mxu0
        %477 = vmatprep.mubr.f32.mxu0 0.0
        %478 = vmatmul.mubr.f32.gmra.mrb[0].mxu0 %v333
        %v479 = vpop.f32.mrb[0].mxu0
        %v480 = vadd.f32 0.0, %v479
        %v481 = vpop.f32.mrb[0].mxu0
        %482 = vmatprep.mubr.f32.mxu0 0.0
        %483 = vmatmul.mubr.f32.gmra.mrb[0].mxu0 %v334
        %v484 = vpop.f32.mrb[0].mxu0
        %v485 = vadd.f32 0.0, %v484
        %v486 = vpop.f32.mrb[0].mxu0
        %487 = vmatprep.mubr.f32.mxu0 0.0
        %488 = vmatmul.mubr.f32.gmra.mrb[0].mxu0 %v335
        %v489 = vpop.f32.mrb[0].mxu0
        %v490 = vadd.f32 0.0, %v489
        %v491 = vpop.f32.mrb[0].mxu0
        %492 = vmatprep.mubr.f32.mxu0 0.0
        %493 = vmatmul.mubr.f32.gmra.mrb[0].mxu0 %v336
        %v494 = vpop.f32.mrb[0].mxu0
        %v495 = vadd.f32 0.0, %v494
        %v496 = vpop.f32.mrb[0].mxu0
        %497 = vmatprep.mubr.f32.mxu0 0.0
        %498 = vmatmul.mubr.f32.gmra.mrb[0].mxu0 %v337
        %v499 = vpop.f32.mrb[0].mxu0
        %v500 = vadd.f32 0.0, %v499
        %v501 = vpop.f32.mrb[0].mxu0
        %502 = vmatprep.mubr.f32.mxu0 0.0
        %503 = vmatmul.mubr.f32.gmra.mrb[0].mxu0 %v338
        %v504 = vpop.f32.mrb[0].mxu0
        %v505 = vadd.f32 0.0, %v504
        %v506 = vpop.f32.mrb[0].mxu0
        %507 = vmatprep.mubr.f32.mxu0 0.0
        %508 = vmatmul.mubr.f32.gmra.mrb[0].mxu0 %v339
        %v509 = vpop.f32.mrb[0].mxu0
        %v510 = vadd.f32 0.0, %v509
        %v511 = vpop.f32.mrb[0].mxu0
        %512 = vmatprep.mubr.f32.mxu0 0.0
        %513 = vmatmul.mubr.f32.gmra.mrb[0].mxu0 %v340
        %v514 = vpop.f32.mrb[0].mxu0
        %v515 = vadd.f32 0.0, %v514
        %v516 = vpop.f32.mrb[0].mxu0
        %517 = vmatprep.mubr.f32.mxu0 0.0
        %518 = vmatmul.mubr.f32.gmra.mrb[0].mxu0 %v341
        %v519 = vpop.f32.mrb[0].mxu0
        %v520 = vadd.f32 0.0, %v519
        %v521 = vpop.f32.mrb[0].mxu0
        %522 = vmatprep.mubr.f32.mxu0 0.0
        %523 = vmatmul.mubr.f32.gmra.mrb[0].mxu0 %v342
        %v524 = vpop.f32.mrb[0].mxu0
        %v525 = vadd.f32 0.0, %v524
        %v526 = vpop.f32.mrb[0].mxu0
        %527 = vmatprep.mubr.f32.mxu0 0.0
        %528 = vmatmul.mubr.f32.gmra.mrb[0].mxu0 %v343
        %v529 = vpop.f32.mrb[0].mxu0
        %v530 = vadd.f32 0.0, %v529
        %v531 = vpop.f32.mrb[0].mxu0
        %532 = vmatprep.mubr.f32.mxu0 0.0
        %533 = vmatmul.mubr.f32.gmra.mrb[0].mxu0 %v344
        %v534 = vpop.f32.mrb[0].mxu0
        %v535 = vadd.f32 0.0, %v534
        %v536 = vpop.f32.mrb[0].mxu0
        %537 = vmatprep.mubr.f32.mxu0 0.0
        %538 = vmatmul.mubr.f32.gmra.mrb[0].mxu0 %v345
        %v539 = vpop.f32.mrb[0].mxu0
        %v540 = vadd.f32 0.0, %v539
        %v541 = vpop.f32.mrb[0].mxu0
        %542 = vmatprep.mubr.f32.mxu0 0.0
        %543 = vmatmul.mubr.f32.gmra.mrb[0].mxu0 %v346
        %v544 = vpop.f32.mrb[0].mxu0
        %v545 = vadd.f32 0.0, %v544
        %v546 = vpop.f32.mrb[0].mxu0
        %547 = vmatprep.mubr.f32.mxu0 0.0
        %548 = vmatmul.mubr.f32.gmra.mrb[0].mxu0 %v347
        %v549 = vpop.f32.mrb[0].mxu0
        %v550 = vadd.f32 0.0, %v549
        %v551 = vpop.f32.mrb[0].mxu0
        %552 = vmatprep.mubr.f32.mxu0 0.0
        %553 = vmatmul.mubr.f32.gmra.mrb[0].mxu0 %v348
        %v554 = vpop.f32.mrb[0].mxu0
        %v555 = vadd.f32 0.0, %v554
        %v556 = vpop.f32.mrb[0].mxu0
        %557 = vmatprep.mubr.f32.mxu0 0.0
        %558 = vmatmul.mubr.f32.gmra.mrb[0].mxu0 %v349
        %v559 = vpop.f32.mrb[0].mxu0
        %v560 = vadd.f32 0.0, %v559
        %v561 = vpop.f32.mrb[0].mxu0
        %562 = vmatprep.mubr.f32.mxu0 0.0
        %563 = vmatmul.mubr.f32.gmra.mrb[0].mxu0 %v350
        %v564 = vpop.f32.mrb[0].mxu0
        %v565 = vadd.f32 0.0, %v564
        %v566 = vpop.f32.mrb[0].mxu0
        %567 = vmatprep.mubr.f32.mxu0 0.0
        %568 = vmatmul.mubr.f32.gmra.mrb[0].mxu0 %v351
        %v569 = vpop.f32.mrb[0].mxu0
        %v570 = vadd.f32 0.0, %v569
        %v571 = vpop.f32.mrb[0].mxu0
        %572 = vmatprep.mubr.f32.mxu0 0.0
        %573 = vmatmul.mubr.f32.gmra.mrb[0].mxu0 %v352
        %v574 = vpop.f32.mrb[0].mxu0
        %v575 = vadd.f32 0.0, %v574
        %v576 = vpop.f32.mrb[0].mxu0
        %577 = vmatprep.mubr.f32.mxu0 0.0
        %578 = vmatmul.mubr.f32.gmra.mrb[0].mxu0 %v353
        %v579 = vpop.f32.mrb[0].mxu0
        %v580 = vadd.f32 0.0, %v579
        %v581 = vpop.f32.mrb[0].mxu0
        %582 = vmatprep.mubr.f32.mxu0 0.0
        %583 = vmatmul.mubr.f32.gmra.mrb[0].mxu0 %v354
        %v584 = vpop.f32.mrb[0].mxu0
        %v585 = vadd.f32 0.0, %v584
        %v586 = vpop.f32.mrb[0].mxu0
        %587 = vmatprep.mubr.f32.mxu0 0.0
        %588 = vmatmul.mubr.f32.gmra.mrb[0].mxu0 %v355
        %v589 = vpop.f32.mrb[0].mxu0
        %v590 = vadd.f32 0.0, %v589
        %v591 = vpop.f32.mrb[0].mxu0
        %592 = vmatprep.mubr.f32.mxu0 0.0
        %593 = vmatmul.mubr.f32.gmra.mrb[0].mxu0 %v356
        %v594 = vpop.f32.mrb[0].mxu0
        %v595 = vadd.f32 0.0, %v594
        %v596 = vpop.f32.mrb[0].mxu0
        %597 = vdwg.mxu0
        %v598 = vadd.f32 %v293, %v440
        %v599 = vadd.f32 %v294, %v445
        %v600 = vadd.f32 %v295, %v450
        %v601 = vadd.f32 %v296, %v455
        %v602 = vadd.f32 %v297, %v460
        %v603 = vadd.f32 %v298, %v465
        %v604 = vadd.f32 %v299, %v470
        %v605 = vadd.f32 %v300, %v475
        %v606 = vadd.f32 %v301, %v480
        %v607 = vadd.f32 %v302, %v485
        %v608 = vadd.f32 %v303, %v490
        %v609 = vadd.f32 %v304, %v495
        %v610 = vadd.f32 %v305, %v500
        %v611 = vadd.f32 %v306, %v505
        %v612 = vadd.f32 %v307, %v510
        %v613 = vadd.f32 %v308, %v515
        %v614 = vadd.f32 %v309, %v520
        %v615 = vadd.f32 %v310, %v525
        %v616 = vadd.f32 %v311, %v530
        %v617 = vadd.f32 %v312, %v535
        %v618 = vadd.f32 %v313, %v540
        %v619 = vadd.f32 %v314, %v545
        %v620 = vadd.f32 %v315, %v550
        %v621 = vadd.f32 %v316, %v555
        %v622 = vadd.f32 %v317, %v560
        %v623 = vadd.f32 %v318, %v565
        %v624 = vadd.f32 %v319, %v570
        %v625 = vadd.f32 %v320, %v575
        %v626 = vadd.f32 %v321, %v580
        %v627 = vadd.f32 %v322, %v585
        %v628 = vadd.f32 %v323, %v590
        %v629 = vadd.f32 %v324, %v595
        %630 = vst [vmem:[#allocation2] sm:$0xff] %v598
        %631 = vst [vmem:[#allocation2 + $0x8] sm:$0xff] %v599
        %632 = vst [vmem:[#allocation2 + $0x10] sm:$0xff] %v600
        %633 = vst [vmem:[#allocation2 + $0x18] sm:$0xff] %v601
        %634 = vst [vmem:[#allocation2 + $0x20] sm:$0xff] %v602
        %635 = vst [vmem:[#allocation2 + $0x28] sm:$0xff] %v603
        %636 = vst [vmem:[#allocation2 + $0x30] sm:$0xff] %v604
        %637 = vst [vmem:[#allocation2 + $0x38] sm:$0xff] %v605
        %638 = vst [vmem:[#allocation2 + $0x40] sm:$0xff] %v606
        %639 = vst [vmem:[#allocation2 + $0x48] sm:$0xff] %v607
        %640 = vst [vmem:[#allocation2 + $0x50] sm:$0xff] %v608
        %641 = vst [vmem:[#allocation2 + $0x58] sm:$0xff] %v609
        %642 = vst [vmem:[#allocation2 + $0x60] sm:$0xff] %v610
        %643 = vst [vmem:[#allocation2 + $0x68] sm:$0xff] %v611
        %644 = vst [vmem:[#allocation2 + $0x70] sm:$0xff] %v612
        %645 = vst [vmem:[#allocation2 + $0x78] sm:$0xff] %v613
        %646 = vst [vmem:[#allocation2 + $0x80] sm:$0xff] %v614
        %647 = vst [vmem:[#allocation2 + $0x88] sm:$0xff] %v615
        %648 = vst [vmem:[#allocation2 + $0x90] sm:$0xff] %v616
        %649 = vst [vmem:[#allocation2 + $0x98] sm:$0xff] %v617
        %650 = vst [vmem:[#allocation2 + $0xa0] sm:$0xff] %v618
        %651 = vst [vmem:[#allocation2 + $0xa8] sm:$0xff] %v619
        %652 = vst [vmem:[#allocation2 + $0xb0] sm:$0xff] %v620
        %653 = vst [vmem:[#allocation2 + $0xb8] sm:$0xff] %v621
        %654 = vst [vmem:[#allocation2 + $0xc0] sm:$0xff] %v622
        %655 = vst [vmem:[#allocation2 + $0xc8] sm:$0xff] %v623
        %656 = vst [vmem:[#allocation2 + $0xd0] sm:$0xff] %v624
        %657 = vst [vmem:[#allocation2 + $0xd8] sm:$0xff] %v625
        %658 = vst [vmem:[#allocation2 + $0xe0] sm:$0xff] %v626
        %659 = vst [vmem:[#allocation2 + $0xe8] sm:$0xff] %v627
        %660 = vst [vmem:[#allocation2 + $0xf0] sm:$0xff] %v628
        %661 = vst [vmem:[#allocation2 + $0xf8] sm:$0xff] %v629
        // Predicated region
        $region45: #{tpu_custom_call.1} parent=31 // pred_check
          %p662 = pneg %p257
        $region46: #{tpu_custom_call.1} parent=31 // pred_check_branch
          %664 = sbr.rel (%p662) target = $region48
        $region47: #{tpu_custom_call.1} parent=31 // pred_region
          %v665 = vld [vmem:[#allocation2] sm:$0xff]
          %v666 = vld [vmem:[#allocation2 + $0x8] sm:$0xff]
          %v667 = vld [vmem:[#allocation2 + $0x10] sm:$0xff]
          %v668 = vld [vmem:[#allocation2 + $0x18] sm:$0xff]
          %v669 = vld [vmem:[#allocation2 + $0x20] sm:$0xff]
          %v670 = vld [vmem:[#allocation2 + $0x28] sm:$0xff]
          %v671 = vld [vmem:[#allocation2 + $0x30] sm:$0xff]
          %v672 = vld [vmem:[#allocation2 + $0x38] sm:$0xff]
          %v673 = vld [vmem:[#allocation2 + $0x40] sm:$0xff]
          %v674 = vld [vmem:[#allocation2 + $0x48] sm:$0xff]
          %v675 = vld [vmem:[#allocation2 + $0x50] sm:$0xff]
          %v676 = vld [vmem:[#allocation2 + $0x58] sm:$0xff]
          %v677 = vld [vmem:[#allocation2 + $0x60] sm:$0xff]
          %v678 = vld [vmem:[#allocation2 + $0x68] sm:$0xff]
          %v679 = vld [vmem:[#allocation2 + $0x70] sm:$0xff]
          %v680 = vld [vmem:[#allocation2 + $0x78] sm:$0xff]
          %v681 = vld [vmem:[#allocation2 + $0x80] sm:$0xff]
          %v682 = vld [vmem:[#allocation2 + $0x88] sm:$0xff]
          %v683 = vld [vmem:[#allocation2 + $0x90] sm:$0xff]
          %v684 = vld [vmem:[#allocation2 + $0x98] sm:$0xff]
          %v685 = vld [vmem:[#allocation2 + $0xa0] sm:$0xff]
          %v686 = vld [vmem:[#allocation2 + $0xa8] sm:$0xff]
          %v687 = vld [vmem:[#allocation2 + $0xb0] sm:$0xff]
          %v688 = vld [vmem:[#allocation2 + $0xb8] sm:$0xff]
          %v689 = vld [vmem:[#allocation2 + $0xc0] sm:$0xff]
          %v690 = vld [vmem:[#allocation2 + $0xc8] sm:$0xff]
          %v691 = vld [vmem:[#allocation2 + $0xd0] sm:$0xff]
          %v692 = vld [vmem:[#allocation2 + $0xd8] sm:$0xff]
          %v693 = vld [vmem:[#allocation2 + $0xe0] sm:$0xff]
          %v694 = vld [vmem:[#allocation2 + $0xe8] sm:$0xff]
          %v695 = vld [vmem:[#allocation2 + $0xf0] sm:$0xff]
          %v696 = vld [vmem:[#allocation2 + $0xf8] sm:$0xff]
          %v697 = vld [vmem:[%s255] sm:$0x1]
          %v699 = vlaneseq
          %v700 = vshrl.u32 %v699, 7
          %v701 = vsub.s32 0, %v700
          %v702 = vrot.slane %v697, %v701
          %v704 = vadd.f32 %v665, %v702
          %v705 = vadd.f32 %v666, %v702
          %v706 = vadd.f32 %v667, %v702
          %v707 = vadd.f32 %v668, %v702
          %v708 = vadd.f32 %v669, %v702
          %v709 = vadd.f32 %v670, %v702
          %v710 = vadd.f32 %v671, %v702
          %v711 = vadd.f32 %v672, %v702
          %v712 = vadd.f32 %v673, %v702
          %v713 = vadd.f32 %v674, %v702
          %v714 = vadd.f32 %v675, %v702
          %v715 = vadd.f32 %v676, %v702
          %v716 = vadd.f32 %v677, %v702
          %v717 = vadd.f32 %v678, %v702
          %v718 = vadd.f32 %v679, %v702
          %v719 = vadd.f32 %v680, %v702
          %v720 = vadd.f32 %v681, %v702
          %v721 = vadd.f32 %v682, %v702
          %v722 = vadd.f32 %v683, %v702
          %v723 = vadd.f32 %v684, %v702
          %v724 = vadd.f32 %v685, %v702
          %v725 = vadd.f32 %v686, %v702
          %v726 = vadd.f32 %v687, %v702
          %v727 = vadd.f32 %v688, %v702
          %v728 = vadd.f32 %v689, %v702
          %v729 = vadd.f32 %v690, %v702
          %v730 = vadd.f32 %v691, %v702
          %v731 = vadd.f32 %v692, %v702
          %v732 = vadd.f32 %v693, %v702
          %v733 = vadd.f32 %v694, %v702
          %v734 = vadd.f32 %v695, %v702
          %v735 = vadd.f32 %v696, %v702
          %736 = vst [vmem:[%s250] sm:$0xff] %v704
          %737 = vst [vmem:[%s250 + $0x8] sm:$0xff] %v705
          %738 = vst [vmem:[%s250 + $0x10] sm:$0xff] %v706
          %739 = vst [vmem:[%s250 + $0x18] sm:$0xff] %v707
          %740 = vst [vmem:[%s250 + $0x20] sm:$0xff] %v708
          %741 = vst [vmem:[%s250 + $0x28] sm:$0xff] %v709
          %742 = vst [vmem:[%s250 + $0x30] sm:$0xff] %v710
          %743 = vst [vmem:[%s250 + $0x38] sm:$0xff] %v711
          %744 = vst [vmem:[%s250 + $0x40] sm:$0xff] %v712
          %745 = vst [vmem:[%s250 + $0x48] sm:$0xff] %v713
          %746 = vst [vmem:[%s250 + $0x50] sm:$0xff] %v714
          %747 = vst [vmem:[%s250 + $0x58] sm:$0xff] %v715
          %748 = vst [vmem:[%s250 + $0x60] sm:$0xff] %v716
          %749 = vst [vmem:[%s250 + $0x68] sm:$0xff] %v717
          %750 = vst [vmem:[%s250 + $0x70] sm:$0xff] %v718
          %751 = vst [vmem:[%s250 + $0x78] sm:$0xff] %v719
          %752 = vst [vmem:[%s250 + $0x80] sm:$0xff] %v720
          %753 = vst [vmem:[%s250 + $0x88] sm:$0xff] %v721
          %754 = vst [vmem:[%s250 + $0x90] sm:$0xff] %v722
          %755 = vst [vmem:[%s250 + $0x98] sm:$0xff] %v723
          %756 = vst [vmem:[%s250 + $0xa0] sm:$0xff] %v724
          %757 = vst [vmem:[%s250 + $0xa8] sm:$0xff] %v725
          %758 = vst [vmem:[%s250 + $0xb0] sm:$0xff] %v726
          %759 = vst [vmem:[%s250 + $0xb8] sm:$0xff] %v727
          %760 = vst [vmem:[%s250 + $0xc0] sm:$0xff] %v728
          %761 = vst [vmem:[%s250 + $0xc8] sm:$0xff] %v729
          %762 = vst [vmem:[%s250 + $0xd0] sm:$0xff] %v730
          %763 = vst [vmem:[%s250 + $0xd8] sm:$0xff] %v731
          %764 = vst [vmem:[%s250 + $0xe0] sm:$0xff] %v732
          %765 = vst [vmem:[%s250 + $0xe8] sm:$0xff] %v733
          %766 = vst [vmem:[%s250 + $0xf0] sm:$0xff] %v734
          %767 = vst [vmem:[%s250 + $0xf8] sm:$0xff] %v735
        $region48: #{tpu_custom_call.1} parent=31 // pred_fallthru
          _
        %s768 = sand.u32 %s132, 1
        %s769 = scalar_lea.sflag [#allocation5], %s768
        %s770 = sand.u32 %s132, 1
        %s771 = smul.addr %s770, 256
        %s772 = scalar_lea.vmem [#allocation8], %s771
        // Predicated region
        $region49: #{tpu_custom_call.1} parent=31 // pred_check
          %p773 = pneg %p142
        $region50: #{tpu_custom_call.1} parent=31 // pred_check_branch
          %775 = sbr.rel (%p773) target = $region52
        $region51: #{tpu_custom_call.1} parent=31 // pred_region
          %s776 = smul.u32 32, %s26
          %s778 = ssub.s32 4096, 4096
          %779 = vsyncadd %s769, %s778
          %s780 = smul.addr %s776, 3
          %s781 = sadd.s32 %s27, %s780
          %s782 = smul.addr %s781, 128
          %s783 = scalar_lea.hbm %s3, %s782
          %s784 = sshll.u32 %s772, 4
          %s785 = int_to_ptr.vmem [resolvable:$true] %s784
          %790 = dma.vmem_to_hbm [thread:$0]  %s785, 4096, %s783, %s769, 128, 384, 8
        $region52: #{tpu_custom_call.1} parent=31 // pred_fallthru
          _
      $region32: #{tpu_custom_call.1} parent=5 // pred_fallthru
        _
      %p791 = scmp.le.s32.totalorder 2, %s16
      // Predicated region
      $region53: #{tpu_custom_call.1} parent=5 // pred_check
        %p792 = pneg %p791
      $region54: #{tpu_custom_call.1} parent=5 // pred_check_branch
        %794 = sbr.rel (%p792) target = $region56
      $region55: #{tpu_custom_call.1} parent=5 // pred_region
        %s795 = ssub.s32 %s16, 2
        // Predicated region
        $region57: #{tpu_custom_call.1} parent=55 // pred_check
          %p796 = pneg %p148
        $region58: #{tpu_custom_call.1} parent=55 // pred_check_branch
          %798 = sbr.rel (%p796) target = $region60
        $region59: #{tpu_custom_call.1} parent=55 // pred_region
          %s799 = sand.u32 %s133, 1
          %s800 = scalar_lea.sflag [#allocation5], %s799
          %s801 = sand.u32 %s133, 1
          %s802 = smul.addr %s801, 256
          %s803 = scalar_lea.vmem [#allocation8], %s802
          %804 = dma.done %s800, 4096
        $region60: #{tpu_custom_call.1} parent=55 // pred_fallthru
          _
      $region56: #{tpu_custom_call.1} parent=5 // pred_fallthru
        _
    $region6: #{tpu_custom_call.1} parent=1 // loop_footer
      %s20 = sadd.s32 1, %s16
    $region7: #{tpu_custom_call.1} parent=1 // loop_footer_branch
      %15 = sbr.rel target = $region3
    $region8: #{tpu_custom_call.1} parent=1 // loop_exit
      _
    %805 = vsyncpa [#allocation4], 1
    %s806 = scalar_lea.sflag [#allocation4], 1
    %807 = vsyncpa %s806, 1
    %808 = vsyncpa [#allocation7], 1
    %s809 = scalar_lea.sflag [#allocation7], 1
    %810 = vsyncpa %s809, 1
    %811 = vsyncpa [#allocation5], 1
    %s812 = scalar_lea.sflag [#allocation5], 1
    %813 = vsyncpa %s812, 1

</llo_original>
